<compile_context>
chip_gen: v5e
topology: v5e:2x2
jax: 0.10.0
libtpu: 0.0.40
codegen_flags: <defaults>
</compile_context>

<pallas_src>
import jax
import jax.numpy as jnp
from jax.experimental import pallas as pl
from jax.experimental.pallas import tpu as pltpu


def _gated_enhance_kernel(x1_ref, x2_ref,
                          w1a_ref, w1b_ref, b1_ref,
                          wg2_ref, bg2_ref,
                          out_ref):
    x1 = x1_ref[0]                 # (C1, tL)  -- pixels on the lane axis
    x2 = x2_ref[0]                 # (C2, tL)

    # One fused MXU pass for both Cin-contraction convs:
    #   rows [0:C1)      -> FeatureFusion conv
    #   rows [C1:2*C1)   -> first GatingMechanism conv
    # Splitting W into the x1 / x2 halves replaces the channel concat.
    y = (jnp.dot(w1a_ref[...], x1, preferred_element_type=jnp.float32)
         + jnp.dot(w1b_ref[...], x2, preferred_element_type=jnp.float32)
         + b1_ref[...])            # (2*C1, tL)

    c1 = out_ref.shape[1]
    fused = y[:c1, :]                       # (C1, tL)
    h = jnp.maximum(y[c1:, :], 0.0)         # ReLU, (C1, tL)

    g = jax.nn.sigmoid(
        jnp.dot(wg2_ref[...], h, preferred_element_type=jnp.float32)
        + bg2_ref[...])                     # (C1, tL)

    # enhanced = gate * fused + (1 - gate) * x1
    out_ref[0] = (g * fused + (1.0 - g) * x1).astype(out_ref.dtype)


def gated_feature_enhancement(x1, x2, params, *, tl=2048):
    """x1: (N, C1, H, W), x2: (N, C2, H, W) float32 (NCHW, like PyTorch).

    params: PyTorch-conv-shaped (wf (C1,Cin), bf (C1,), wg1 (C1,Cin), bg1 (C1,),
            wg2 (C1,C1), bg2 (C1,)).
    """
    N, C1, H, W = x1.shape
    _, C2, _, _ = x2.shape
    Cin = C1 + C2
    L = H * W

    # Channel-major views: free reshapes, no transpose / concat HBM sweeps.
    x1_cm = x1.reshape(N, C1, L)
    x2_cm = x2.reshape(N, C2, L)

    # Lane-dense pixel tile (multiple of 128); pad the pixel axis instead of
    # asserting divisibility.  Note for v7x: budget tl so that
    # 2 * tl * (C1 + C2 + C1) * 4 bytes (double-buffered blocks) + weights
    # stays well inside the 32 MiB default scoped VMEM.
    tl = max(128, min(tl, pl.cdiv(L, 128) * 128))
    L_pad = pl.cdiv(L, tl) * tl
    if L_pad != L:
        pad = ((0, 0), (0, 0), (0, L_pad - L))
        x1_cm = jnp.pad(x1_cm, pad)
        x2_cm = jnp.pad(x2_cm, pad)

    wf, bf, wg1, bg1, wg2, bg2 = params
    # Stack fusion conv + first gate conv row-wise, then split the contraction
    # into the x1 / x2 halves.
    w1 = jnp.concatenate([wf, wg1], axis=0)               # (2*C1, Cin)
    w1a = w1[:, :C1]                                      # (2*C1, C1)
    w1b = w1[:, C1:]                                      # (2*C1, C2)
    b1 = jnp.concatenate([bf, bg1], axis=0)[:, None]      # (2*C1, 1)
    bg2c = bg2[:, None]                                   # (C1, 1)

    grid = (N, L_pad // tl)
    full = lambda n, p: (0, 0)

    flops = int(2 * N * L * (Cin * 2 * C1 + C1 * C1) + 6 * N * L * C1)
    transcendentals = int(N * L * C1)                     # sigmoid exp
    bytes_accessed = int(4 * (N * L * (C1 + C2 + C1)
                              + w1.size + wg2.size + 3 * C1))

    out_cm = pl.pallas_call(
        _gated_enhance_kernel,
        out_shape=jax.ShapeDtypeStruct((N, C1, L_pad), x1.dtype),
        grid_spec=pltpu.PrefetchScalarGridSpec(
            num_scalar_prefetch=0,
            grid=grid,
            in_specs=[
                pl.BlockSpec((1, C1, tl), lambda n, p: (n, 0, p)),  # x1 (also residual)
                pl.BlockSpec((1, C2, tl), lambda n, p: (n, 0, p)),  # x2
                pl.BlockSpec((2 * C1, C1), full),                   # W1 half acting on x1
                pl.BlockSpec((2 * C1, C2), full),                   # W1 half acting on x2
                pl.BlockSpec((2 * C1, 1), full),                    # stacked bias [bf; bg1]
                pl.BlockSpec((C1, C1), full),                       # Wg2
                pl.BlockSpec((C1, 1), full),                        # bg2
            ],
            out_specs=pl.BlockSpec((1, C1, tl), lambda n, p: (n, 0, p)),
        ),
        compiler_params=pltpu.CompilerParams(
            dimension_semantics=("parallel", "parallel")),
        cost_estimate=pl.CostEstimate(
            flops=flops,
            transcendentals=transcendentals,
            bytes_accessed=bytes_accessed),
    )(x1_cm, x2_cm, w1a, w1b, b1, wg2, bg2c)

    # TODO(synk): optional bf16 activation path (keep f32 MXU accumulation) for
    # another ~2x on the memory-bound portion when accuracy budget allows.
    return out_cm[:, :, :L].reshape(N, C1, H, W)


def init_params(key, c1, c2, dtype=jnp.float32):
    """Deterministic synthetic params matching nn.Conv2d(k=1) shapes.

    Conv weight (Cout, Cin, 1, 1) is stored squeezed as (Cout, Cin); bias (Cout,).
    The channel-major kernel uses W @ x directly, so no transpose is needed.
    """
    ks = jax.random.split(key, 6)
    cin = c1 + c2
    wf = jax.random.normal(ks[0], (c1, cin), dtype) * 0.1
    bf = jax.random.normal(ks[1], (c1,), dtype) * 0.1
    wg1 = jax.random.normal(ks[2], (c1, cin), dtype) * 0.1
    bg1 = jax.random.normal(ks[3], (c1,), dtype) * 0.1
    wg2 = jax.random.normal(ks[4], (c1, c1), dtype) * 0.1
    bg2 = jax.random.normal(ks[5], (c1,), dtype) * 0.1
    return (wf, bf, wg1, bg1, wg2, bg2)


def _reference(x1, x2, params):
    """Pure-JAX reference mirroring the PyTorch forward (for sanity check)."""
    wf, bf, wg1, bg1, wg2, bg2 = params

    def conv1x1(x, w, b):
        return jnp.einsum('oc,nchw->nohw', w, x) + b[None, :, None, None]

    xc = jnp.concatenate([x1, x2], axis=1)
    fused = conv1x1(xc, wf, bf)
    g = jax.nn.sigmoid(conv1x1(jnp.maximum(conv1x1(xc, wg1, bg1), 0.0), wg2, bg2))
    return g * fused + (1.0 - g) * x1


if __name__ == "__main__":
    key = jax.random.PRNGKey(0)
    k1, k2, kp = jax.random.split(key, 3)

    N, C1, C2, H, W = 2, 4, 4, 16, 16
    x1 = jax.random.normal(k1, (N, C1, H, W), jnp.float32)
    x2 = jax.random.normal(k2, (N, C2, H, W), jnp.float32)
    params = init_params(kp, C1, C2)

    out = gated_feature_enhancement(x1, x2, params)
    out = jax.block_until_ready(out)

    ref = _reference(x1, x2, params)
    assert out.shape == (N, C1, H, W)
    assert jnp.allclose(out, ref, atol=1e-4, rtol=1e-4), "mismatch vs reference"

    print("KERNEL_OK")
</pallas_src>

<mosaic_0001>
module attributes {stable_mosaic.version = 11 : i64} {
  func.func @_gated_enhance_kernel(%arg0: i32, %arg1: i32, %arg2: memref<1x4x256xf32, #tpu.memory_space<vmem>>, %arg3: memref<1x4x256xf32, #tpu.memory_space<vmem>>, %arg4: memref<8x4xf32, #tpu.memory_space<vmem>>, %arg5: memref<8x4xf32, #tpu.memory_space<vmem>>, %arg6: memref<8x1xf32, #tpu.memory_space<vmem>>, %arg7: memref<4x4xf32, #tpu.memory_space<vmem>>, %arg8: memref<4x1xf32, #tpu.memory_space<vmem>>, %arg9: memref<1x4x256xf32, #tpu.memory_space<vmem>>) attributes {dimension_semantics = [#tpu.dimension_semantics<parallel>, #tpu.dimension_semantics<parallel>], iteration_bounds = array<i64: 2, 1>, scalar_prefetch = 0 : i64, scratch_operands = 0 : i64, tpu.core_type = #tpu.core_type<tc>, window_params = [{transform_indices = @transform_0, window_bounds = array<i64: 1, 4, 256>}, {transform_indices = @transform_1, window_bounds = array<i64: 1, 4, 256>}, {pipeline_mode = #tpu.pipeline_mode<synchronous>, transform_indices = @transform_2, window_bounds = array<i64: 8, 4>}, {pipeline_mode = #tpu.pipeline_mode<synchronous>, transform_indices = @transform_3, window_bounds = array<i64: 8, 4>}, {pipeline_mode = #tpu.pipeline_mode<synchronous>, transform_indices = @transform_4, window_bounds = array<i64: 8, 1>}, {pipeline_mode = #tpu.pipeline_mode<synchronous>, transform_indices = @transform_5, window_bounds = array<i64: 4, 4>}, {pipeline_mode = #tpu.pipeline_mode<synchronous>, transform_indices = @transform_6, window_bounds = array<i64: 4, 1>}, {transform_indices = @transform_7, window_bounds = array<i64: 1, 4, 256>}]} {
    %c0 = arith.constant 0 : index
    %c0_0 = arith.constant 0 : index
    %c0_1 = arith.constant 0 : index
    %0 = vector.load %arg2[%c0, %c0_0, %c0_1] : memref<1x4x256xf32, #tpu.memory_space<vmem>>, vector<1x4x256xf32>
    %1 = vector.shape_cast %0 : vector<1x4x256xf32> to vector<4x256xf32>
    %c0_2 = arith.constant 0 : index
    %c0_3 = arith.constant 0 : index
    %c0_4 = arith.constant 0 : index
    %2 = vector.load %arg3[%c0_2, %c0_3, %c0_4] : memref<1x4x256xf32, #tpu.memory_space<vmem>>, vector<1x4x256xf32>
    %3 = vector.shape_cast %2 : vector<1x4x256xf32> to vector<4x256xf32>
    %c0_5 = arith.constant 0 : index
    %c0_6 = arith.constant 0 : index
    %4 = vector.load %arg4[%c0_5, %c0_6] : memref<8x4xf32, #tpu.memory_space<vmem>>, vector<8x4xf32>
    %cst = arith.constant dense<0.000000e+00> : vector<8x256xf32>
    %5 = tpu.matmul %4, %1, %cst {dimension_numbers = #tpu.dot_dimension_numbers<[1], [0], [0], [1], [0, 0, 1, 1], [], []>} : vector<8x4xf32>, vector<4x256xf32>, vector<8x256xf32> -> vector<8x256xf32>
    %c0_7 = arith.constant 0 : index
    %c0_8 = arith.constant 0 : index
    %6 = vector.load %arg5[%c0_7, %c0_8] : memref<8x4xf32, #tpu.memory_space<vmem>>, vector<8x4xf32>
    %cst_9 = arith.constant dense<0.000000e+00> : vector<8x256xf32>
    %7 = tpu.matmul %6, %3, %cst_9 {dimension_numbers = #tpu.dot_dimension_numbers<[1], [0], [0], [1], [0, 0, 1, 1], [], []>} : vector<8x4xf32>, vector<4x256xf32>, vector<8x256xf32> -> vector<8x256xf32>
    %8 = arith.addf %5, %7 : vector<8x256xf32>
    %c0_10 = arith.constant 0 : index
    %c0_11 = arith.constant 0 : index
    %9 = vector.load %arg6[%c0_10, %c0_11] : memref<8x1xf32, #tpu.memory_space<vmem>>, vector<8x1xf32>
    %10 = vector.broadcast %9 : vector<8x1xf32> to vector<8x256xf32>
    %11 = arith.addf %8, %10 : vector<8x256xf32>
    %12 = vector.extract_strided_slice %11 {offsets = [0, 0], sizes = [4, 256], strides = [1, 1]} : vector<8x256xf32> to vector<4x256xf32>
    %13 = vector.extract_strided_slice %11 {offsets = [4, 0], sizes = [4, 256], strides = [1, 1]} : vector<8x256xf32> to vector<4x256xf32>
    %cst_12 = arith.constant 0.000000e+00 : f32
    %14 = vector.broadcast %cst_12 : f32 to vector<4x256xf32>
    %15 = arith.maximumf %13, %14 : vector<4x256xf32>
    %c0_13 = arith.constant 0 : index
    %c0_14 = arith.constant 0 : index
    %16 = vector.load %arg7[%c0_13, %c0_14] : memref<4x4xf32, #tpu.memory_space<vmem>>, vector<4x4xf32>
    %cst_15 = arith.constant dense<0.000000e+00> : vector<4x256xf32>
    %17 = tpu.matmul %16, %15, %cst_15 {dimension_numbers = #tpu.dot_dimension_numbers<[1], [0], [0], [1], [0, 0, 1, 1], [], []>} : vector<4x4xf32>, vector<4x256xf32>, vector<4x256xf32> -> vector<4x256xf32>
    %c0_16 = arith.constant 0 : index
    %c0_17 = arith.constant 0 : index
    %18 = vector.load %arg8[%c0_16, %c0_17] : memref<4x1xf32, #tpu.memory_space<vmem>>, vector<4x1xf32>
    %19 = vector.broadcast %18 : vector<4x1xf32> to vector<4x256xf32>
    %20 = arith.addf %17, %19 : vector<4x256xf32>
    %21 = arith.negf %20 : vector<4x256xf32>
    %22 = math.exp %21 : vector<4x256xf32>
    %cst_18 = arith.constant 1.000000e+00 : f32
    %23 = vector.broadcast %cst_18 : f32 to vector<4x256xf32>
    %24 = arith.addf %23, %22 : vector<4x256xf32>
    %25 = arith.divf %23, %24 : vector<4x256xf32>
    %26 = arith.mulf %25, %12 : vector<4x256xf32>
    %cst_19 = arith.constant 1.000000e+00 : f32
    %27 = vector.broadcast %cst_19 : f32 to vector<4x256xf32>
    %28 = arith.subf %27, %25 : vector<4x256xf32>
    %29 = arith.mulf %28, %1 : vector<4x256xf32>
    %30 = arith.addf %26, %29 : vector<4x256xf32>
    %c0_20 = arith.constant 0 : index
    %c0_21 = arith.constant 0 : index
    %c0_22 = arith.constant 0 : index
    %31 = vector.load %arg9[%c0_20, %c0_21, %c0_22] : memref<1x4x256xf32, #tpu.memory_space<vmem>>, vector<1x4x256xf32>
    %32 = vector.shape_cast %31 : vector<1x4x256xf32> to vector<4x256xf32>
    %33 = vector.shape_cast %30 : vector<4x256xf32> to vector<1x4x256xf32>
    tpu.vector_store %arg9[%c0_20, %c0_21, %c0_22], %33 {strides = array<i32>} : memref<1x4x256xf32, #tpu.memory_space<vmem>>, vector<1x4x256xf32>,
    return
  }
  func.func @transform_0(%arg0: i32, %arg1: i32) -> (i32, i32, i32) {
    %c0_i32 = arith.constant 0 : i32
    %c0_i32_0 = arith.constant 0 : i32
    return %arg0, %c0_i32, %arg1 : i32, i32, i32
  }
  func.func @transform_1(%arg0: i32, %arg1: i32) -> (i32, i32, i32) {
    %c0_i32 = arith.constant 0 : i32
    %c0_i32_0 = arith.constant 0 : i32
    return %arg0, %c0_i32, %arg1 : i32, i32, i32
  }
  func.func @transform_2(%arg0: i32, %arg1: i32) -> (i32, i32) {
    %c0_i32 = arith.constant 0 : i32
    %c0_i32_0 = arith.constant 0 : i32
    %c0_i32_1 = arith.constant 0 : i32
    return %c0_i32, %c0_i32_0 : i32, i32
  }
  func.func @transform_3(%arg0: i32, %arg1: i32) -> (i32, i32) {
    %c0_i32 = arith.constant 0 : i32
    %c0_i32_0 = arith.constant 0 : i32
    %c0_i32_1 = arith.constant 0 : i32
    return %c0_i32, %c0_i32_0 : i32, i32
  }
  func.func @transform_4(%arg0: i32, %arg1: i32) -> (i32, i32) {
    %c0_i32 = arith.constant 0 : i32
    %c0_i32_0 = arith.constant 0 : i32
    %c0_i32_1 = arith.constant 0 : i32
    return %c0_i32, %c0_i32_0 : i32, i32
  }
  func.func @transform_5(%arg0: i32, %arg1: i32) -> (i32, i32) {
    %c0_i32 = arith.constant 0 : i32
    %c0_i32_0 = arith.constant 0 : i32
    %c0_i32_1 = arith.constant 0 : i32
    return %c0_i32, %c0_i32_0 : i32, i32
  }
  func.func @transform_6(%arg0: i32, %arg1: i32) -> (i32, i32) {
    %c0_i32 = arith.constant 0 : i32
    %c0_i32_0 = arith.constant 0 : i32
    %c0_i32_1 = arith.constant 0 : i32
    return %c0_i32, %c0_i32_0 : i32, i32
  }
  func.func @transform_7(%arg0: i32, %arg1: i32) -> (i32, i32, i32) {
    %c0_i32 = arith.constant 0 : i32
    %c0_i32_0 = arith.constant 0 : i32
    return %arg0, %c0_i32, %arg1 : i32, i32, i32
  }
}

</mosaic_0001>

<llo_original>
// kernel: tpu_custom_call.1
$region0: #{tpu_custom_call.1}
  #allocation0 [shape = 'u32[]', space=smem, size = 0x4, offset = 0x4, fixed_abs, tag = 'smem constant byte address 0x4 - core index']
  #allocation1 [shape = 'u32[72,128]{1,0:T(1,128)}', space=vmem, size = 0x9000, scoped, tag = 'internal scratch']
  %s0 = inlined_call_operand.vmem [shape: f32[2,4,256], index: 0, kind: input, shape index: {}]
  %s1 = inlined_call_operand.vmem [shape: f32[2,4,256], index: 1, kind: input, shape index: {}]
  %s2 = inlined_call_operand.vmem [shape: f32[8,4], index: 2, kind: input, shape index: {}]
  %s3 = inlined_call_operand.vmem [shape: f32[8,4], index: 3, kind: input, shape index: {}]
  %s4 = inlined_call_operand.vmem [shape: f32[8,1], index: 4, kind: input, shape index: {}]
  %s5 = inlined_call_operand.vmem [shape: f32[4,4], index: 5, kind: input, shape index: {}]
  %s6 = inlined_call_operand.vmem [shape: f32[4,1], index: 6, kind: input, shape index: {}]
  %s7 = inlined_call_operand.hbm [shape: f32[2,4,256], index: 7, kind: output, shape index: {}]
  %s8 = sld [smem:[#allocation0]]
  $region61: #{tpu_custom_call.1} parent=0
    _
  %s10 = ssub.s32 1, %s8
  %s11 = scalar_select 0, %s10, %s8
  $region1: #{tpu_custom_call.1} parent=0
    #allocation2 [shape = 'u8[8192]{0}', space=vmem, size = 0x2000, scoped, tag = 'output window, operand 0']
    #allocation3 [shape = 's32[2]{0}', space=sflag, size = 0x8, scoped, tag = 'scoped memory for tpu_custom_call.1']
    %12 = vsyncpa [#allocation3], 0
    %s13 = scalar_lea.sflag [#allocation3], 1
    %14 = vsyncpa %s13, 0
    loop: start=0, step=1, limit=4
    $region2: #{tpu_custom_call.1} parent=1 // loop_pre_header
      _
    $region3: #{tpu_custom_call.1} parent=1 // loop_header
      %s16 = sphi 0, %s20
      %p17 = scmp.ge.s32.totalorder %s16, 4
      %s23 = sphi 0, %s35
      %s24 = sphi 0, %s31
      %s25 = sphi 0, %s23
      %s26 = sphi 0, %s24
      %s27 = sphi 0, %s25
      %s28 = sphi 0, %s26
      %s40 = sphi 0, %s42
      %s43 = sphi 0, %s40
      %s44 = sphi 0, %s43
      %s60 = sphi 0, %s44
      %s68 = sphi 0, %s70
      %s71 = sphi 0, %s68
      %s72 = sphi 0, %s71
      %s88 = sphi 0, %s72
      %s92 = sphi 0, %s92
      %s94 = sphi 0, %s92
      %s95 = sphi 0, %s94
      %s109 = sphi 0, %s95
      %s113 = sphi 0, %s113
      %s115 = sphi 0, %s113
      %s116 = sphi 0, %s115
      %s130 = sphi 0, %s116
      %s134 = sphi 0, %s134
      %s136 = sphi 0, %s134
      %s137 = sphi 0, %s136
      %s151 = sphi 0, %s137
      %s155 = sphi 0, %s155
      %s157 = sphi 0, %s155
      %s158 = sphi 0, %s157
      %s172 = sphi 0, %s158
      %s176 = sphi 0, %s176
      %s178 = sphi 0, %s176
      %s179 = sphi 0, %s178
      %s193 = sphi 0, %s179
      %s201 = sphi 0, %s203
      %s204 = sphi 0, %s201
      %s205 = sphi 0, %s204
      %s221 = sphi 0, %s205
    $region4: #{tpu_custom_call.1} parent=1 // loop_header_branch
      %19 = sbr.rel (%p17) target = $region8
    $region5: #{tpu_custom_call.1} parent=1 // loop_body
      %s21 = ssub.s32 %s16, 1
      %s22 = ssub.s32 %s16, 2
      %s29 = sadd.s32 1, %s24
      %p30 = scmp.ge.s32.totalorder %s29, 1
      %s31 = scalar_select %p30, 0, %s29
      %s32 = sadd.s32 1, %s23
      %s33 = scalar_select %p30, %s32, %s23
      %p34 = scmp.ge.s32.totalorder %s33, 2
      %s35 = scalar_select %p34, 0, %s33
      %s36 = ssub.s32 %s23, %s35
      %s37 = ssub.s32 %s24, %s31
      %s38 = sor.u32 %s36, %s37
      %p39 = scmp.eq.s32.totalorder %s38, 0
      %s41 = sadd.s32 %s40, 1
      %s42 = scalar_select %p39, %s40, %s41
      %p45 = pneg %p39
      %p46 = scmp.eq.s32.totalorder %s16, 1
      %p47 = por %p45, %p46
      %p48 = scmp.ne.s32.totalorder %s40, %s43
      %p49 = scmp.eq.s32.totalorder %s16, 0
      %p50 = por %p48, %p49
      %p51 = scmp.ne.s32.totalorder %s40, %s43
      %p52 = scmp.eq.s32.totalorder %s21, 1
      %p53 = por %p51, %p52
      %p54 = scmp.ne.s32.totalorder %s43, %s44
      %p55 = scmp.eq.s32.totalorder %s21, 0
      %p56 = por %p54, %p55
      %p57 = scmp.ne.s32.totalorder %s43, %s44
      %p58 = scmp.eq.s32.totalorder %s22, 1
      %p59 = por %p57, %p58
      %p61 = scmp.ne.s32.totalorder %s44, %s60
      %p62 = scmp.eq.s32.totalorder %s22, 0
      %p63 = por %p61, %p62
      %s64 = ssub.s32 %s23, %s35
      %s65 = ssub.s32 %s24, %s31
      %s66 = sor.u32 %s64, %s65
      %p67 = scmp.eq.s32.totalorder %s66, 0
      %s69 = sadd.s32 %s68, 1
      %s70 = scalar_select %p67, %s68, %s69
      %p73 = pneg %p67
      %p74 = scmp.eq.s32.totalorder %s16, 1
      %p75 = por %p73, %p74
      %p76 = scmp.ne.s32.totalorder %s68, %s71
      %p77 = scmp.eq.s32.totalorder %s16, 0
      %p78 = por %p76, %p77
      %p79 = scmp.ne.s32.totalorder %s68, %s71
      %p80 = scmp.eq.s32.totalorder %s21, 1
      %p81 = por %p79, %p80
      %p82 = scmp.ne.s32.totalorder %s71, %s72
      %p83 = scmp.eq.s32.totalorder %s21, 0
      %p84 = por %p82, %p83
      %p85 = scmp.ne.s32.totalorder %s71, %s72
      %p86 = scmp.eq.s32.totalorder %s22, 1
      %p87 = por %p85, %p86
      %p89 = scmp.ne.s32.totalorder %s72, %s88
      %p90 = scmp.eq.s32.totalorder %s22, 0
      %p91 = por %p89, %p90
      %s93 = sadd.s32 %s92, 1
      %p96 = scmp.eq.s32.totalorder %s16, 1
      %p97 = scmp.ne.s32.totalorder %s92, %s94
      %p98 = scmp.eq.s32.totalorder %s16, 0
      %p99 = por %p97, %p98
      %p100 = scmp.ne.s32.totalorder %s92, %s94
      %p101 = scmp.eq.s32.totalorder %s21, 1
      %p102 = por %p100, %p101
      %p103 = scmp.ne.s32.totalorder %s94, %s95
      %p104 = scmp.eq.s32.totalorder %s21, 0
      %p105 = por %p103, %p104
      %p106 = scmp.ne.s32.totalorder %s94, %s95
      %p107 = scmp.eq.s32.totalorder %s22, 1
      %p108 = por %p106, %p107
      %p110 = scmp.ne.s32.totalorder %s95, %s109
      %p111 = scmp.eq.s32.totalorder %s22, 0
      %p112 = por %p110, %p111
      %s114 = sadd.s32 %s113, 1
      %p117 = scmp.eq.s32.totalorder %s16, 1
      %p118 = scmp.ne.s32.totalorder %s113, %s115
      %p119 = scmp.eq.s32.totalorder %s16, 0
      %p120 = por %p118, %p119
      %p121 = scmp.ne.s32.totalorder %s113, %s115
      %p122 = scmp.eq.s32.totalorder %s21, 1
      %p123 = por %p121, %p122
      %p124 = scmp.ne.s32.totalorder %s115, %s116
      %p125 = scmp.eq.s32.totalorder %s21, 0
      %p126 = por %p124, %p125
      %p127 = scmp.ne.s32.totalorder %s115, %s116
      %p128 = scmp.eq.s32.totalorder %s22, 1
      %p129 = por %p127, %p128
      %p131 = scmp.ne.s32.totalorder %s116, %s130
      %p132 = scmp.eq.s32.totalorder %s22, 0
      %p133 = por %p131, %p132
      %s135 = sadd.s32 %s134, 1
      %p138 = scmp.eq.s32.totalorder %s16, 1
      %p139 = scmp.ne.s32.totalorder %s134, %s136
      %p140 = scmp.eq.s32.totalorder %s16, 0
      %p141 = por %p139, %p140
      %p142 = scmp.ne.s32.totalorder %s134, %s136
      %p143 = scmp.eq.s32.totalorder %s21, 1
      %p144 = por %p142, %p143
      %p145 = scmp.ne.s32.totalorder %s136, %s137
      %p146 = scmp.eq.s32.totalorder %s21, 0
      %p147 = por %p145, %p146
      %p148 = scmp.ne.s32.totalorder %s136, %s137
      %p149 = scmp.eq.s32.totalorder %s22, 1
      %p150 = por %p148, %p149
      %p152 = scmp.ne.s32.totalorder %s137, %s151
      %p153 = scmp.eq.s32.totalorder %s22, 0
      %p154 = por %p152, %p153
      %s156 = sadd.s32 %s155, 1
      %p159 = scmp.eq.s32.totalorder %s16, 1
      %p160 = scmp.ne.s32.totalorder %s155, %s157
      %p161 = scmp.eq.s32.totalorder %s16, 0
      %p162 = por %p160, %p161
      %p163 = scmp.ne.s32.totalorder %s155, %s157
      %p164 = scmp.eq.s32.totalorder %s21, 1
      %p165 = por %p163, %p164
      %p166 = scmp.ne.s32.totalorder %s157, %s158
      %p167 = scmp.eq.s32.totalorder %s21, 0
      %p168 = por %p166, %p167
      %p169 = scmp.ne.s32.totalorder %s157, %s158
      %p170 = scmp.eq.s32.totalorder %s22, 1
      %p171 = por %p169, %p170
      %p173 = scmp.ne.s32.totalorder %s158, %s172
      %p174 = scmp.eq.s32.totalorder %s22, 0
      %p175 = por %p173, %p174
      %s177 = sadd.s32 %s176, 1
      %p180 = scmp.eq.s32.totalorder %s16, 1
      %p181 = scmp.ne.s32.totalorder %s176, %s178
      %p182 = scmp.eq.s32.totalorder %s16, 0
      %p183 = por %p181, %p182
      %p184 = scmp.ne.s32.totalorder %s176, %s178
      %p185 = scmp.eq.s32.totalorder %s21, 1
      %p186 = por %p184, %p185
      %p187 = scmp.ne.s32.totalorder %s178, %s179
      %p188 = scmp.eq.s32.totalorder %s21, 0
      %p189 = por %p187, %p188
      %p190 = scmp.ne.s32.totalorder %s178, %s179
      %p191 = scmp.eq.s32.totalorder %s22, 1
      %p192 = por %p190, %p191
      %p194 = scmp.ne.s32.totalorder %s179, %s193
      %p195 = scmp.eq.s32.totalorder %s22, 0
      %p196 = por %p194, %p195
      %s197 = ssub.s32 %s23, %s35
      %s198 = ssub.s32 %s24, %s31
      %s199 = sor.u32 %s197, %s198
      %p200 = scmp.eq.s32.totalorder %s199, 0
      %s202 = sadd.s32 %s201, 1
      %s203 = scalar_select %p200, %s201, %s202
      %p206 = pneg %p200
      %p207 = scmp.eq.s32.totalorder %s16, 1
      %p208 = por %p206, %p207
      %p209 = scmp.ne.s32.totalorder %s201, %s204
      %p210 = scmp.eq.s32.totalorder %s16, 0
      %p211 = por %p209, %p210
      %p212 = scmp.ne.s32.totalorder %s201, %s204
      %p213 = scmp.eq.s32.totalorder %s21, 1
      %p214 = por %p212, %p213
      %p215 = scmp.ne.s32.totalorder %s204, %s205
      %p216 = scmp.eq.s32.totalorder %s21, 0
      %p217 = por %p215, %p216
      %p218 = scmp.ne.s32.totalorder %s204, %s205
      %p219 = scmp.eq.s32.totalorder %s22, 1
      %p220 = por %p218, %p219
      %p222 = scmp.ne.s32.totalorder %s205, %s221
      %p223 = scmp.eq.s32.totalorder %s22, 0
      %p224 = por %p222, %p223
      %p225 = scmp.le.s32.totalorder 1, %s16
      %p226 = scmp.lt.s32.totalorder %s16, 3
      %p227 = pnand %p225, %p226
      %p228 = pneg %p227
      // Predicated region
      $region9: #{tpu_custom_call.1} parent=5 // pred_check
        _
      $region10: #{tpu_custom_call.1} parent=5 // pred_check_branch
        %230 = sbr.rel (%p227) target = $region12
      $region11: #{tpu_custom_call.1} parent=5 // pred_region
        %s231 = ssub.s32 %s16, 1
        // Predicated region
        $region13: #{tpu_custom_call.1} parent=11 // pred_check
          %p232 = pneg %p105
        $region14: #{tpu_custom_call.1} parent=11 // pred_check_branch
          %234 = sbr.rel (%p232) target = $region16
        $region15: #{tpu_custom_call.1} parent=11 // pred_region
          _
        $region16: #{tpu_custom_call.1} parent=11 // pred_fallthru
          _
        // Predicated region
        $region17: #{tpu_custom_call.1} parent=11 // pred_check
          %p235 = pneg %p126
        $region18: #{tpu_custom_call.1} parent=11 // pred_check_branch
          %237 = sbr.rel (%p235) target = $region20
        $region19: #{tpu_custom_call.1} parent=11 // pred_region
          _
        $region20: #{tpu_custom_call.1} parent=11 // pred_fallthru
          _
        // Predicated region
        $region21: #{tpu_custom_call.1} parent=11 // pred_check
          %p238 = pneg %p147
        $region22: #{tpu_custom_call.1} parent=11 // pred_check_branch
          %240 = sbr.rel (%p238) target = $region24
        $region23: #{tpu_custom_call.1} parent=11 // pred_region
          _
        $region24: #{tpu_custom_call.1} parent=11 // pred_fallthru
          _
        // Predicated region
        $region25: #{tpu_custom_call.1} parent=11 // pred_check
          %p241 = pneg %p168
        $region26: #{tpu_custom_call.1} parent=11 // pred_check_branch
          %243 = sbr.rel (%p241) target = $region28
        $region27: #{tpu_custom_call.1} parent=11 // pred_region
          _
        $region28: #{tpu_custom_call.1} parent=11 // pred_fallthru
          _
        // Predicated region
        $region29: #{tpu_custom_call.1} parent=11 // pred_check
          %p244 = pneg %p189
        $region30: #{tpu_custom_call.1} parent=11 // pred_check_branch
          %246 = sbr.rel (%p244) target = $region32
        $region31: #{tpu_custom_call.1} parent=11 // pred_region
          _
        $region32: #{tpu_custom_call.1} parent=11 // pred_fallthru
          _
      $region12: #{tpu_custom_call.1} parent=5 // pred_fallthru
        _
      %p247 = scmp.lt.s32.totalorder %s16, 2
      // Predicated region
      $region33: #{tpu_custom_call.1} parent=5 // pred_check
        %p248 = pneg %p247
      $region34: #{tpu_custom_call.1} parent=5 // pred_check_branch
        %250 = sbr.rel (%p248) target = $region36
      $region35: #{tpu_custom_call.1} parent=5 // pred_region
        // Predicated region
        $region37: #{tpu_custom_call.1} parent=35 // pred_check
          %p251 = pneg %p50
        $region38: #{tpu_custom_call.1} parent=35 // pred_check_branch
          %253 = sbr.rel (%p251) target = $region40
        $region39: #{tpu_custom_call.1} parent=35 // pred_region
          %s254 = smul.u32 2, %s24
          %p255 = scmp.lt.s32.totalorder %s23, 1
          %s256 = scalar_select %p255, %s23, 1
          %p257 = scmp.lt.s32.totalorder %s254, 1
          %s258 = scalar_select %p257, %s254, 1
          %s259 = smul.addr %s256, 2
          %s260 = sadd.s32 %s258, %s259
          %s261 = smul.addr %s260, 4
          %s262 = scalar_lea.vmem %s0, %s261
          %s263 = smul.u32 2, %s24
        $region40: #{tpu_custom_call.1} parent=35 // pred_fallthru
          _
        // Predicated region
        $region41: #{tpu_custom_call.1} parent=35 // pred_check
          %p264 = pneg %p78
        $region42: #{tpu_custom_call.1} parent=35 // pred_check_branch
          %266 = sbr.rel (%p264) target = $region44
        $region43: #{tpu_custom_call.1} parent=35 // pred_region
          %s267 = smul.u32 2, %s24
          %p268 = scmp.lt.s32.totalorder %s23, 1
          %s269 = scalar_select %p268, %s23, 1
          %p270 = scmp.lt.s32.totalorder %s267, 1
          %s271 = scalar_select %p270, %s267, 1
          %s272 = smul.addr %s269, 2
          %s273 = sadd.s32 %s271, %s272
          %s274 = smul.addr %s273, 4
          %s275 = scalar_lea.vmem %s1, %s274
          %s276 = smul.u32 2, %s24
        $region44: #{tpu_custom_call.1} parent=35 // pred_fallthru
          _
      $region36: #{tpu_custom_call.1} parent=5 // pred_fallthru
        _
      %p277 = scmp.le.s32.totalorder 1, %s16
      %p278 = scmp.lt.s32.totalorder %s16, 3
      %p279 = pnand %p277, %p278
      %p280 = pneg %p279
      // Predicated region
      $region45: #{tpu_custom_call.1} parent=5 // pred_check
        _
      $region46: #{tpu_custom_call.1} parent=5 // pred_check_branch
        %282 = sbr.rel (%p279) target = $region48
      $region47: #{tpu_custom_call.1} parent=5 // pred_region
        %s283 = ssub.s32 %s16, 1
        %s284 = smul.u32 2, %s26
        %p285 = scmp.lt.s32.totalorder %s25, 1
        %s286 = scalar_select %p285, %s25, 1
        %p287 = scmp.lt.s32.totalorder %s284, 1
        %s288 = scalar_select %p287, %s284, 1
        %s289 = smul.addr %s286, 2
        %s290 = sadd.s32 %s288, %s289
        %s291 = smul.addr %s290, 4
        %s292 = scalar_lea.vmem %s0, %s291
        %p293 = pneg %p56
        %p294 = pneg %p53
        %s295 = smul.u32 2, %s26
        %p296 = scmp.lt.s32.totalorder %s25, 1
        %s297 = scalar_select %p296, %s25, 1
        %p298 = scmp.lt.s32.totalorder %s295, 1
        %s299 = scalar_select %p298, %s295, 1
        %s300 = smul.addr %s297, 2
        %s301 = sadd.s32 %s299, %s300
        %s302 = smul.addr %s301, 4
        %s303 = scalar_lea.vmem %s1, %s302
        %p304 = pneg %p84
        %p305 = pneg %p81
        %p306 = pneg %p105
        %p307 = pneg %p102
        %p308 = pneg %p126
        %p309 = pneg %p123
        %p310 = pneg %p147
        %p311 = pneg %p144
        %p312 = pneg %p168
        %p313 = pneg %p165
        %p314 = pneg %p189
        %p315 = pneg %p186
        %p316 = pneg %p217
        %p317 = pneg %p214
        %s318 = sand.u32 %s204, 1
        %s319 = scalar_lea.sflag [#allocation3], %s318
        %s320 = sand.u32 %s204, 1
        %s321 = smul.addr %s320, 8
        %s322 = scalar_lea.vmem [#allocation2], %s321
        %s323 = smul.u32 2, %s26
        %p324 = scmp.lt.s32.totalorder %s25, 1
        %s325 = scalar_select %p324, %s25, 1
        %p326 = scmp.lt.s32.totalorder %s323, 1
        %s327 = scalar_select %p326, %s323, 1
        %s328 = smul.addr %s325, 2
        %s329 = sadd.s32 %s327, %s328
        %s330 = smul.addr %s329, 4
        %s331 = scalar_lea.vmem %s0, %s330
        %s332 = smul.u32 2, %s26
        %s333 = smul.u32 2, %s26
        %p334 = scmp.lt.s32.totalorder %s25, 1
        %s335 = scalar_select %p334, %s25, 1
        %p336 = scmp.lt.s32.totalorder %s333, 1
        %s337 = scalar_select %p336, %s333, 1
        %s338 = smul.addr %s335, 2
        %s339 = sadd.s32 %s337, %s338
        %s340 = smul.addr %s339, 4
        %s341 = scalar_lea.vmem %s1, %s340
        %s342 = smul.u32 2, %s26
        %s343 = smul.u32 2, %s26
        %v344 = vld [vmem:[%s331] sm:$0xff]
        %v345 = vld [vmem:[%s341] sm:$0xff]
        %v346 = vld [vmem:[%s2] sm:$0xff]
        %v347 = vld [vmem:[%s3] sm:$0xff]
        %349 = vst [vmem:[#allocation1] ss:$2 sm:$0xff] %v345
        %v350 = vld.sshfl [vmem:[#allocation1] sm:$0xff pattern:$0x75316420]
        %v351 = vld.sshfl [vmem:[#allocation1 + $0x8] sm:$0xff pattern:$0x75316420]
        %vm352 = vcmask 31744
        %v354 = vsel %vm352, %v347, 0
        %vm356 = vcmask 1043456
        %v357 = vsel %vm356, %v350, 0
        %v359 = vsel %vm356, %v351, 0
        %361 = vmatpush.msra.mxu0 0.0
        %362 = vmatpush.msra.mxu0 0.0
        %363 = vmatpush.msra.mxu0 0.0
        %364 = vmatpush.msra.mxu0 0.0
        %365 = vmatpush.msra.mxu0 0.0
        %366 = vmatpush.msra.mxu0 0.0
        %367 = vmatpush.msra.mxu0 0.0
        %368 = vmatpush.msra.mxu0 0.0
        %369 = vmatpush.msra.mxu0 0.0
        %370 = vmatpush.msra.mxu0 0.0
        %371 = vmatpush.msra.mxu0 0.0
        %372 = vmatpush.msra.mxu0 0.0
        %373 = vmatpush.msra.mxu0 0.0
        %374 = vmatpush.msra.mxu0 0.0
        %375 = vmatpush.msra.mxu0 0.0
        %376 = vmatpush.msra.mxu0 %v357
        %377 = vmatmul.f32.gmra.mxu0 %v354
        %v378 = vpop.f32.mrf.mxu0
        %v379 = vadd.f32 0.0, %v378
        %380 = vdwg.mxu0
        %381 = vmatpush.msra.mxu0 0.0
        %382 = vmatpush.msra.mxu0 0.0
        %383 = vmatpush.msra.mxu0 0.0
        %384 = vmatpush.msra.mxu0 0.0
        %385 = vmatpush.msra.mxu0 0.0
        %386 = vmatpush.msra.mxu0 0.0
        %387 = vmatpush.msra.mxu0 0.0
        %388 = vmatpush.msra.mxu0 0.0
        %389 = vmatpush.msra.mxu0 0.0
        %390 = vmatpush.msra.mxu0 0.0
        %391 = vmatpush.msra.mxu0 0.0
        %392 = vmatpush.msra.mxu0 0.0
        %393 = vmatpush.msra.mxu0 0.0
        %394 = vmatpush.msra.mxu0 0.0
        %395 = vmatpush.msra.mxu0 0.0
        %396 = vmatpush.msra.mxu0 %v359
        %397 = vmatmul.f32.gmra.mxu0 %v354
        %v398 = vpop.f32.mrf.mxu0
        %v399 = vadd.f32 0.0, %v398
        %400 = vdwg.mxu0
        %402 = vst [vmem:[#allocation1] ss:$2 sm:$0xff] %v344
        %v403 = vld.sshfl [vmem:[#allocation1] sm:$0xff pattern:$0x75316420]
        %v404 = vld.sshfl [vmem:[#allocation1 + $0x8] sm:$0xff pattern:$0x75316420]
        %v406 = vsel %vm352, %v346, 0
        %v408 = vsel %vm356, %v403, 0
        %v410 = vsel %vm356, %v404, 0
        %412 = vmatpush.msra.mxu0 0.0
        %413 = vmatpush.msra.mxu0 0.0
        %414 = vmatpush.msra.mxu0 0.0
        %415 = vmatpush.msra.mxu0 0.0
        %416 = vmatpush.msra.mxu0 0.0
        %417 = vmatpush.msra.mxu0 0.0
        %418 = vmatpush.msra.mxu0 0.0
        %419 = vmatpush.msra.mxu0 0.0
        %420 = vmatpush.msra.mxu0 0.0
        %421 = vmatpush.msra.mxu0 0.0
        %422 = vmatpush.msra.mxu0 0.0
        %423 = vmatpush.msra.mxu0 0.0
        %424 = vmatpush.msra.mxu0 0.0
        %425 = vmatpush.msra.mxu0 0.0
        %426 = vmatpush.msra.mxu0 0.0
        %427 = vmatpush.msra.mxu0 %v408
        %428 = vmatmul.f32.gmra.mxu0 %v406
        %v429 = vpop.f32.mrf.mxu0
        %v430 = vadd.f32 %v379, %v429
        %431 = vdwg.mxu0
        %432 = vmatpush.msra.mxu0 0.0
        %433 = vmatpush.msra.mxu0 0.0
        %434 = vmatpush.msra.mxu0 0.0
        %435 = vmatpush.msra.mxu0 0.0
        %436 = vmatpush.msra.mxu0 0.0
        %437 = vmatpush.msra.mxu0 0.0
        %438 = vmatpush.msra.mxu0 0.0
        %439 = vmatpush.msra.mxu0 0.0
        %440 = vmatpush.msra.mxu0 0.0
        %441 = vmatpush.msra.mxu0 0.0
        %442 = vmatpush.msra.mxu0 0.0
        %443 = vmatpush.msra.mxu0 0.0
        %444 = vmatpush.msra.mxu0 0.0
        %445 = vmatpush.msra.mxu0 0.0
        %446 = vmatpush.msra.mxu0 0.0
        %447 = vmatpush.msra.mxu0 %v410
        %448 = vmatmul.f32.gmra.mxu0 %v406
        %v449 = vpop.f32.mrf.mxu0
        %v450 = vadd.f32 %v399, %v449
        %451 = vdwg.mxu0
        %v452 = vld [vmem:[%s4] sm:$0xff]
        %454 = vset.pattern.permute.xlu0 0
        %455 = vperm.xlu0 %454, %v452
        %v456 = vpop.permute.xlu0 %455
        %v458 = vadd.f32 %v430, %v456
        %v459 = vadd.f32 %v450, %v456
        %v460 = vmax.f32 %v458, 0.0
        %v461 = vmax.f32 %v459, 0.0
        %v462 = vld [vmem:[%s5] sm:$0xf]
        %v463 = vld [vmem:[%s6] sm:$0xf]
        %465 = vset.pattern.permute.xlu0 0
        %466 = vperm.xlu0 %465, %v463
        %v467 = vpop.permute.xlu0 %466
        %v471 = vrot.slane %v460, 4
        %v472 = vrot.slane %v461, 4
        %v474 = vsel %vm352, %v462, 0
        %v476 = vsel %vm356, %v471, 0
        %v478 = vsel %vm356, %v472, 0
        %480 = vmatpush.msra.mxu0 0.0
        %481 = vmatpush.msra.mxu0 0.0
        %482 = vmatpush.msra.mxu0 0.0
        %483 = vmatpush.msra.mxu0 0.0
        %484 = vmatpush.msra.mxu0 0.0
        %485 = vmatpush.msra.mxu0 0.0
        %486 = vmatpush.msra.mxu0 0.0
        %487 = vmatpush.msra.mxu0 0.0
        %488 = vmatpush.msra.mxu0 0.0
        %489 = vmatpush.msra.mxu0 0.0
        %490 = vmatpush.msra.mxu0 0.0
        %491 = vmatpush.msra.mxu0 0.0
        %492 = vmatpush.msra.mxu0 0.0
        %493 = vmatpush.msra.mxu0 0.0
        %494 = vmatpush.msra.mxu0 0.0
        %495 = vmatpush.msra.mxu0 %v476
        %496 = vmatmul.f32.gmra.mxu0 %v474
        %v497 = vpop.f32.mrf.mxu0
        %v498 = vadd.f32 %v467, %v497
        %499 = vdwg.mxu0
        %500 = vmatpush.msra.mxu0 0.0
        %501 = vmatpush.msra.mxu0 0.0
        %502 = vmatpush.msra.mxu0 0.0
        %503 = vmatpush.msra.mxu0 0.0
        %504 = vmatpush.msra.mxu0 0.0
        %505 = vmatpush.msra.mxu0 0.0
        %506 = vmatpush.msra.mxu0 0.0
        %507 = vmatpush.msra.mxu0 0.0
        %508 = vmatpush.msra.mxu0 0.0
        %509 = vmatpush.msra.mxu0 0.0
        %510 = vmatpush.msra.mxu0 0.0
        %511 = vmatpush.msra.mxu0 0.0
        %512 = vmatpush.msra.mxu0 0.0
        %513 = vmatpush.msra.mxu0 0.0
        %514 = vmatpush.msra.mxu0 0.0
        %515 = vmatpush.msra.mxu0 %v478
        %516 = vmatmul.f32.gmra.mxu0 %v474
        %v517 = vpop.f32.mrf.mxu0
        %v518 = vadd.f32 %v467, %v517
        %519 = vdwg.mxu0
        %v520 = vxor.u32 %v498, 2147483648
        %v521 = vxor.u32 %v518, 2147483648
        %v522 = vmul.f32 %v520, 1.442695
        %v523 = vpow.pop %v522
        %v524 = vmul.f32 %v521, 1.442695
        %v525 = vpow.pop %v524
        %v526 = vadd.f32 %v523, 1.0
        %v527 = vadd.f32 %v525, 1.0
        %v528 = vrcp.pop %v526
        %v529 = vmul.f32 %v526, %v528
        %v530 = vsub.f32 1.0, %v529
        %v531 = vmul.f32 %v528, %v530
        %v532 = vadd.f32 %v528, %v531
        %vm533 = vweird.f32 %v526
        %vm534 = vweird.f32 %v528
        %vm535 = vmor %vm533, %vm534
        %v536 = vsel %vm535, %v528, %v532
        %v537 = vand.u32 2147483647, %v526
        %vm538 = vcmp.eq.f32.partialorder %v537, 8.507059e+37
        %v539 = vand.u32 %v526, 2147483648
        %v540 = vor.u32 1.1754944e-38, %v539
        %v541 = vsel %vm538, %v540, %v536
        %v542 = vmul.f32 1.0, %v541
        %v543 = vrcp.pop %v527
        %v544 = vmul.f32 %v527, %v543
        %v545 = vsub.f32 1.0, %v544
        %v546 = vmul.f32 %v543, %v545
        %v547 = vadd.f32 %v543, %v546
        %vm548 = vweird.f32 %v527
        %vm549 = vweird.f32 %v543
        %vm550 = vmor %vm548, %vm549
        %v551 = vsel %vm550, %v543, %v547
        %v552 = vand.u32 2147483647, %v527
        %vm553 = vcmp.eq.f32.partialorder %v552, 8.507059e+37
        %v554 = vand.u32 %v527, 2147483648
        %v555 = vor.u32 1.1754944e-38, %v554
        %v556 = vsel %vm553, %v555, %v551
        %v557 = vmul.f32 1.0, %v556
        %v558 = vmul.f32 %v542, %v458
        %v559 = vmul.f32 %v557, %v459
        %v560 = vsub.f32 1.0, %v542
        %v561 = vsub.f32 1.0, %v557
        %562 = vst [vmem:[#allocation1] ss:$2 sm:$0xff] %v344
        %v563 = vld.sshfl [vmem:[#allocation1] sm:$0xff pattern:$0x75316420]
        %v564 = vld.sshfl [vmem:[#allocation1 + $0x8] sm:$0xff pattern:$0x75316420]
        %v567 = vmul.f32 %v560, %v563
        %v568 = vmul.f32 %v561, %v564
        %v569 = vadd.f32 %v558, %v567
        %v570 = vadd.f32 %v559, %v568
        %v573 = vrot.slane %v570, 4
        %v574 = vsel %vm356, %v569, %v573
        %576 = vst [vmem:[%s322] sm:$0xff] %v574
        %s577 = sand.u32 %s204, 1
        %s578 = scalar_lea.sflag [#allocation3], %s577
        %s579 = sand.u32 %s204, 1
        %s580 = smul.addr %s579, 8
        %s581 = scalar_lea.vmem [#allocation2], %s580
        // Predicated region
        $region49: #{tpu_custom_call.1} parent=47 // pred_check
          %p582 = pneg %p214
        $region50: #{tpu_custom_call.1} parent=47 // pred_check_branch
          %584 = sbr.rel (%p582) target = $region52
        $region51: #{tpu_custom_call.1} parent=47 // pred_region
          %s585 = smul.u32 2, %s26
          %587 = vsyncadd %s578, 0
          %s588 = smul.addr %s25, 2
          %s589 = sadd.s32 %s585, %s588
          %s590 = smul.addr %s589, 4
          %s591 = scalar_lea.hbm %s7, %s590
          %s593 = sshll.u32 %s581, 4
          %s594 = int_to_ptr.vmem [resolvable:$true] %s593
          %s595 = sshll.u32 %s591, 4
          %s596 = int_to_ptr.hbm [resolvable:$true] %s595
          %598 = dma.vmem_to_hbm [thread:$0]  %s594, 128, %s596, %s578
        $region52: #{tpu_custom_call.1} parent=47 // pred_fallthru
          _
      $region48: #{tpu_custom_call.1} parent=5 // pred_fallthru
        _
      %p599 = scmp.le.s32.totalorder 2, %s16
      // Predicated region
      $region53: #{tpu_custom_call.1} parent=5 // pred_check
        %p600 = pneg %p599
      $region54: #{tpu_custom_call.1} parent=5 // pred_check_branch
        %602 = sbr.rel (%p600) target = $region56
      $region55: #{tpu_custom_call.1} parent=5 // pred_region
        %s603 = ssub.s32 %s16, 2
        // Predicated region
        $region57: #{tpu_custom_call.1} parent=55 // pred_check
          %p604 = pneg %p220
        $region58: #{tpu_custom_call.1} parent=55 // pred_check_branch
          %606 = sbr.rel (%p604) target = $region60
        $region59: #{tpu_custom_call.1} parent=55 // pred_region
          %s607 = sand.u32 %s205, 1
          %s608 = scalar_lea.sflag [#allocation3], %s607
          %s609 = sand.u32 %s205, 1
          %s610 = smul.addr %s609, 8
          %s611 = scalar_lea.vmem [#allocation2], %s610
          %613 = dma.done %s608, 128
        $region60: #{tpu_custom_call.1} parent=55 // pred_fallthru
          _
      $region56: #{tpu_custom_call.1} parent=5 // pred_fallthru
        _
    $region6: #{tpu_custom_call.1} parent=1 // loop_footer
      %s20 = sadd.s32 1, %s16
    $region7: #{tpu_custom_call.1} parent=1 // loop_footer_branch
      %15 = sbr.rel target = $region3
    $region8: #{tpu_custom_call.1} parent=1 // loop_exit
      _
    %614 = vsyncpa [#allocation3], 1
    %s615 = scalar_lea.sflag [#allocation3], 1
    %616 = vsyncpa %s615, 1

</llo_original>
